<compile_context>
chip_gen: v7x
topology: tpu7x:2x2x1
jax: 0.10.0
libtpu: 0.0.40
codegen_flags: <defaults>
</compile_context>

<pallas_src>
import math
from functools import partial

import jax
import jax.numpy as jnp
from jax.experimental import pallas as pl
from jax.experimental.pallas import tpu as pltpu

EPS = 1e-5
NEG_SLOPE = 0.01


def _bn_leaky_conv_kernel(x_ref, scale_ref, shift_ref, wband_ref, bias_ref,
                          o_ref, ypad_ref):
    """One image per grid step.

    x_ref:     (1, H, W*Cin)        f32   lane-dense activation rows
    scale_ref: (1, W*Cin)           f32   BN scale  (gamma * rsqrt(var+eps)), tiled over W
    shift_ref: (1, W*Cin)           f32   BN shift  (beta - mean*scale),      tiled over W
    wband_ref: (KH, W*Cin, Wo*Cout) bf16  banded conv weights (kw taps + Cin folded in)
    bias_ref:  (1, Wo*Cout)         f32   conv bias, tiled over Wo
    o_ref:     (1, Ho, Wo*Cout)     f32   lane-dense output rows (128-wide -> unmasked vst)
    ypad_ref:  (H+2*pad, W*Cin)     f32   VMEM scratch: H-halo only (no W padding needed)
    """
    H = x_ref.shape[1]
    WC = x_ref.shape[2]
    KH = wband_ref.shape[0]
    Ho = o_ref.shape[1]
    WoC = o_ref.shape[2]
    pad = (ypad_ref.shape[0] - H) // 2

    # ---- BN normalize + LeakyReLU: lane-dense (H, W*Cin) rows, f32 on the VPU ----
    x = x_ref[0]                                        # (H, W*Cin)
    xn = x * scale_ref[...] + shift_ref[...]            # per-channel affine via W-tiled rows
    y = jnp.where(xn >= 0, xn, NEG_SLOPE * xn)

    # ---- H-halo scratch: zero ONLY the 2*pad halo rows; interior written exactly once ----
    # Halo is re-zeroed every step: the scratch persists across grid steps and each core of
    # a "parallel" grid gets its own copy, so we make no cross-step assumptions.
    if pad > 0:
        zero_rows = jnp.zeros((pad, WC), jnp.float32)
        ypad_ref[0:pad, :] = zero_rows
        ypad_ref[pad + H:pad + H + pad, :] = zero_rows
    ypad_ref[pad:pad + H, :] = y

    # ---- Conv2d: KH accumulating MXU matmuls, bf16 operands, f32 accumulation ----
    # The kw taps and the Cin contraction live inside the banded weight; the kh taps are
    # plain row offsets into the halo scratch (cheap sublane-offset loads — no slice+reshape
    # copies, no pltpu.roll needed).  Each matmul is (Ho, W*Cin) x (W*Cin, Wo*Cout), i.e.
    # a 64-deep contraction with a 128-lane output (pads to one 128-wide MXU pass on v5e).
    acc = jnp.zeros((Ho, WoC), jnp.float32)
    for kh in range(KH):                                # static unroll (KH == 3)
        lhs = ypad_ref[kh:kh + Ho, :].astype(wband_ref.dtype)
        acc = acc + jnp.dot(lhs, wband_ref[kh],
                            preferred_element_type=jnp.float32)
    o_ref[0] = acc + bias_ref[...]


def _banded_weights(weight_oihw, W, padding, dtype):
    """(Cout, Cin, KH, KW) -> (KH, W*Cin, Wo*Cout) banded matrices.

    band[kh, w*Cin + ci, wo*Cout + co] = weight[co, ci, kh, kw]   with  w = wo + kw - padding.
    Entries with w outside [0, W) are simply absent (zero), which *is* the zero W-padding —
    so activations never need W padding and the kw shift never touches the data.
    This is a one-time per-layer weight transform (precomputed/cached in a real network).
    """
    Cout, Cin, KH, KW = weight_oihw.shape
    Wo = W + 2 * padding - KW + 1
    w_t = jnp.transpose(weight_oihw, (2, 3, 1, 0)).astype(jnp.float32)   # (KH, KW, Cin, Cout)
    bands = []
    for kh in range(KH):
        acc = jnp.zeros((W * Cin, Wo * Cout), jnp.float32)
        for kw in range(KW):
            # ind[w, wo] = 1  iff  w == wo + kw - padding
            ind = jnp.eye(W, Wo, k=padding - kw, dtype=jnp.float32)
            blk = ind[:, None, :, None] * w_t[kh, kw][None, :, None, :]  # (W, Cin, Wo, Cout)
            acc = acc + blk.reshape(W * Cin, Wo * Cout)
        bands.append(acc)
    return jnp.stack(bands, axis=0).astype(dtype)


@partial(jax.jit, static_argnames=("padding", "matmul_dtype"))
def bn_leaky_conv_nhwc(x_nhwc, gamma, beta, weight_oihw, bias, *,
                       padding=1, matmul_dtype=jnp.bfloat16):
    """Fused train-mode BN + LeakyReLU(0.01) + Conv2d(stride=1). NHWC in / NHWC out.

    # TODO(synk): stride != 1, dilation != 1, groups != 1, padding_mode != 'zeros' are not
    #             implemented in this kernel.
    # TODO(synk): this is the BNLeakyConv building block used inside FeatureFusionBlock's
    #             ResUnits; the surrounding ConvBNLeaky chains, Channel/Spatial attention,
    #             fusion and residual adds are not composed here (they would reuse this
    #             same fused conv kernel).
    """
    N, H, W, Cin = x_nhwc.shape
    Cout, Cin_w, KH, KW = weight_oihw.shape
    assert Cin_w == Cin
    Ho = H + 2 * padding - KH + 1
    Wo = W + 2 * padding - KW + 1

    x = x_nhwc.astype(jnp.float32)

    # ---- BN batch statistics (training mode, biased variance), f32, two-pass ----
    # Computed once here (per review guidance) so the main kernel can be gridded; the stats
    # are global over (N, H, W) and must NOT be recomputed per tile.  Two-pass variance
    # avoids the E[x^2] - mean^2 cancellation flagged in the review.
    mean = jnp.mean(x, axis=(0, 1, 2))
    var = jnp.mean(jnp.square(x - mean), axis=(0, 1, 2))
    scale = gamma.astype(jnp.float32) * jax.lax.rsqrt(var + EPS)
    shift = beta.astype(jnp.float32) - mean * scale

    # ---- lane-dense operands (W-tiled per-channel rows; banded weights; tiled bias) ----
    scale_row = jnp.tile(scale, W).reshape(1, W * Cin)            # [w*Cin + ci] -> scale[ci]
    shift_row = jnp.tile(shift, W).reshape(1, W * Cin)
    bias_row = jnp.tile(bias.astype(jnp.float32), Wo).reshape(1, Wo * Cout)
    wband = _banded_weights(weight_oihw, W, padding, matmul_dtype)  # (KH, W*Cin, Wo*Cout)
    x_rows = x.reshape(N, H, W * Cin)                             # free reshape (NHWC contiguous)

    out_rows = pl.pallas_call(
        _bn_leaky_conv_kernel,
        out_shape=jax.ShapeDtypeStruct((N, Ho, Wo * Cout), jnp.float32),
        # One image per step.  TODO(synk): for large H / realistic channel counts, also tile
        # Ho rows (loading KH-1 extra halo rows per tile) to bound per-step VMEM.
        grid=(N,),
        in_specs=[
            pl.BlockSpec((1, H, W * Cin), lambda n: (n, 0, 0)),
            pl.BlockSpec((1, W * Cin), lambda n: (0, 0)),
            pl.BlockSpec((1, W * Cin), lambda n: (0, 0)),
            pl.BlockSpec((KH, W * Cin, Wo * Cout), lambda n: (0, 0, 0)),
            pl.BlockSpec((1, Wo * Cout), lambda n: (0, 0)),
        ],
        out_specs=pl.BlockSpec((1, Ho, Wo * Cout), lambda n: (n, 0, 0)),
        scratch_shapes=[
            pltpu.VMEM((H + 2 * padding, W * Cin), jnp.float32),
        ],
        compiler_params=pltpu.CompilerParams(
            # Batch axis is embarrassingly parallel once BN stats are precomputed ->
            # megacore / 2-TC sharding on v7x.
            dimension_semantics=("parallel",),
            # Per-step working set (input rows + halo scratch + banded weights + output tile,
            # double-buffered) is ~0.2 MiB; 32 MiB is within scoped VMEM on v5e/v6e/v7x.
            vmem_limit_bytes=32 * 1024 * 1024,
        ),
    )(x_rows, scale_row, shift_row, wband, bias_row)

    return out_rows.reshape(N, Ho, Wo, Cout)                      # free reshape back to NHWC


def _reference_nhwc(x_nhwc, gamma, beta, weight_oihw, bias, *, padding=1):
    """Plain-JAX reference matching PyTorch BNLeakyConv.forward (train-mode BN), NHWC."""
    x = x_nhwc.astype(jnp.float32)
    mean = jnp.mean(x, axis=(0, 1, 2))
    var = jnp.mean(jnp.square(x - mean), axis=(0, 1, 2))          # biased variance
    xn = (x - mean) * jax.lax.rsqrt(var + EPS) * gamma + beta
    y = jnp.where(xn >= 0, xn, NEG_SLOPE * xn)
    w_hwio = jnp.transpose(weight_oihw, (2, 3, 1, 0)).astype(jnp.float32)
    out = jax.lax.conv_general_dilated(
        y, w_hwio, window_strides=(1, 1),
        padding=[(padding, padding), (padding, padding)],
        dimension_numbers=("NHWC", "HWIO", "NHWC"))
    return out + bias.astype(jnp.float32)


if __name__ == "__main__":
    # BNLeakyConv(in_channels=4, out_channels=8, kernel_size=3, stride=1, padding=1)
    N, Cin, Cout, H, W, K, PAD = 2, 4, 8, 16, 16, 3, 1

    key = jax.random.PRNGKey(0)
    kx, kw_, kb, kg, kbt = jax.random.split(key, 5)

    # NHWC activations — no layout transposes anywhere on the kernel path.
    x = jax.random.normal(kx, (N, H, W, Cin), dtype=jnp.float32)

    fan_in = Cin * K * K
    bound = 1.0 / math.sqrt(fan_in)
    # PyTorch init would be gamma=1, beta=0; use non-trivial values to exercise the affine path.
    gamma = jax.random.uniform(kg, (Cin,), jnp.float32, 0.5, 1.5)
    beta = jax.random.uniform(kbt, (Cin,), jnp.float32, -0.5, 0.5)
    weight = jax.random.uniform(kw_, (Cout, Cin, K, K), jnp.float32, -bound, bound)
    bias = jax.random.uniform(kb, (Cout,), jnp.float32, -bound, bound)

    ref = _reference_nhwc(x, gamma, beta, weight, bias, padding=PAD)

    # f32-MXU path: tight check of the banded-conv formulation against the plain-JAX reference.
    out_f32 = jax.block_until_ready(
        bn_leaky_conv_nhwc(x, gamma, beta, weight, bias,
                           padding=PAD, matmul_dtype=jnp.float32))
    assert out_f32.shape == (N, H, W, Cout), out_f32.shape
    assert jnp.allclose(out_f32, ref, rtol=1e-3, atol=1e-3), \
        float(jnp.max(jnp.abs(out_f32 - ref)))

    # Default bf16-MXU path (f32 accumulation): looser tolerance for bf16 operand rounding.
    out = jax.block_until_ready(
        bn_leaky_conv_nhwc(x, gamma, beta, weight, bias, padding=PAD))
    assert out.shape == (N, H, W, Cout), out.shape
    assert jnp.allclose(out, ref, rtol=5e-2, atol=5e-2), \
        float(jnp.max(jnp.abs(out - ref)))

    print("KERNEL_OK")
</pallas_src>

<mosaic_0001>
module attributes {stable_mosaic.version = 11 : i64} {
  func.func @_bn_leaky_conv_kernel(%arg0: i32, %arg1: memref<1x16x64xf32, #tpu.memory_space<vmem>>, %arg2: memref<1x64xf32, #tpu.memory_space<vmem>>, %arg3: memref<1x64xf32, #tpu.memory_space<vmem>>, %arg4: memref<3x64x128xf32, #tpu.memory_space<vmem>>, %arg5: memref<1x128xf32, #tpu.memory_space<vmem>>, %arg6: memref<1x16x128xf32, #tpu.memory_space<vmem>>, %arg7: memref<18x64xf32, #tpu.memory_space<vmem>>) attributes {dimension_semantics = [#tpu.dimension_semantics<parallel>], iteration_bounds = array<i64: 2>, scalar_prefetch = 0 : i64, scratch_operands = 1 : i64, tpu.core_type = #tpu.core_type<tc>, window_params = [{transform_indices = @transform_0, window_bounds = array<i64: 1, 16, 64>}, {pipeline_mode = #tpu.pipeline_mode<synchronous>, transform_indices = @transform_1, window_bounds = array<i64: 1, 64>}, {pipeline_mode = #tpu.pipeline_mode<synchronous>, transform_indices = @transform_2, window_bounds = array<i64: 1, 64>}, {pipeline_mode = #tpu.pipeline_mode<synchronous>, transform_indices = @transform_3, window_bounds = array<i64: 3, 64, 128>}, {pipeline_mode = #tpu.pipeline_mode<synchronous>, transform_indices = @transform_4, window_bounds = array<i64: 1, 128>}, {transform_indices = @transform_5, window_bounds = array<i64: 1, 16, 128>}]} {
    %c0 = arith.constant 0 : index
    %c0_0 = arith.constant 0 : index
    %c0_1 = arith.constant 0 : index
    %0 = vector.load %arg1[%c0, %c0_0, %c0_1] : memref<1x16x64xf32, #tpu.memory_space<vmem>>, vector<1x16x64xf32>
    %1 = vector.shape_cast %0 : vector<1x16x64xf32> to vector<16x64xf32>
    %c0_2 = arith.constant 0 : index
    %c0_3 = arith.constant 0 : index
    %2 = vector.load %arg2[%c0_2, %c0_3] : memref<1x64xf32, #tpu.memory_space<vmem>>, vector<1x64xf32>
    %3 = vector.broadcast %2 : vector<1x64xf32> to vector<16x64xf32>
    %4 = arith.mulf %1, %3 : vector<16x64xf32>
    %c0_4 = arith.constant 0 : index
    %c0_5 = arith.constant 0 : index
    %5 = vector.load %arg3[%c0_4, %c0_5] : memref<1x64xf32, #tpu.memory_space<vmem>>, vector<1x64xf32>
    %6 = vector.broadcast %5 : vector<1x64xf32> to vector<16x64xf32>
    %7 = arith.addf %4, %6 : vector<16x64xf32>
    %cst = arith.constant 0.000000e+00 : f32
    %8 = vector.broadcast %cst : f32 to vector<16x64xf32>
    %9 = arith.cmpf oge, %7, %8 : vector<16x64xf32>
    %cst_6 = arith.constant 0.00999999977 : f32
    %10 = vector.broadcast %cst_6 : f32 to vector<16x64xf32>
    %11 = arith.mulf %10, %7 : vector<16x64xf32>
    %12 = arith.select %9, %7, %11 : vector<16x64xi1>, vector<16x64xf32>
    %cst_7 = arith.constant 0.000000e+00 : f32
    %13 = vector.broadcast %cst_7 : f32 to vector<1x64xf32>
    %c0_8 = arith.constant 0 : index
    %c0_9 = arith.constant 0 : index
    %14 = vector.load %arg7[%c0_8, %c0_9] : memref<18x64xf32, #tpu.memory_space<vmem>>, vector<1x64xf32>
    tpu.vector_store %arg7[%c0_8, %c0_9], %13 {strides = array<i32>} : memref<18x64xf32, #tpu.memory_space<vmem>>, vector<1x64xf32>,
    %c17 = arith.constant 17 : index
    %c0_10 = arith.constant 0 : index
    %15 = vector.load %arg7[%c17, %c0_10] : memref<18x64xf32, #tpu.memory_space<vmem>>, vector<1x64xf32>
    tpu.vector_store %arg7[%c17, %c0_10], %13 {strides = array<i32>} : memref<18x64xf32, #tpu.memory_space<vmem>>, vector<1x64xf32>,
    %c1 = arith.constant 1 : index
    %c0_11 = arith.constant 0 : index
    %16 = vector.load %arg7[%c1, %c0_11] : memref<18x64xf32, #tpu.memory_space<vmem>>, vector<16x64xf32>
    tpu.vector_store %arg7[%c1, %c0_11], %12 {strides = array<i32>} : memref<18x64xf32, #tpu.memory_space<vmem>>, vector<16x64xf32>,
    %cst_12 = arith.constant 0.000000e+00 : f32
    %17 = vector.broadcast %cst_12 : f32 to vector<16x128xf32>
    %c0_13 = arith.constant 0 : index
    %c0_14 = arith.constant 0 : index
    %18 = vector.load %arg7[%c0_13, %c0_14] : memref<18x64xf32, #tpu.memory_space<vmem>>, vector<16x64xf32>
    %c0_15 = arith.constant 0 : index
    %c0_16 = arith.constant 0 : index
    %c0_17 = arith.constant 0 : index
    %19 = vector.load %arg4[%c0_15, %c0_16, %c0_17] : memref<3x64x128xf32, #tpu.memory_space<vmem>>, vector<1x64x128xf32>
    %20 = vector.shape_cast %19 : vector<1x64x128xf32> to vector<64x128xf32>
    %cst_18 = arith.constant dense<0.000000e+00> : vector<16x128xf32>
    %21 = tpu.matmul %18, %20, %cst_18 {dimension_numbers = #tpu.dot_dimension_numbers<[1], [0], [0], [1], [0, 0, 1, 1], [], []>} : vector<16x64xf32>, vector<64x128xf32>, vector<16x128xf32> -> vector<16x128xf32>
    %22 = arith.addf %17, %21 : vector<16x128xf32>
    %c1_19 = arith.constant 1 : index
    %c0_20 = arith.constant 0 : index
    %23 = vector.load %arg7[%c1_19, %c0_20] : memref<18x64xf32, #tpu.memory_space<vmem>>, vector<16x64xf32>
    %c1_21 = arith.constant 1 : index
    %c0_22 = arith.constant 0 : index
    %c0_23 = arith.constant 0 : index
    %24 = vector.load %arg4[%c1_21, %c0_22, %c0_23] : memref<3x64x128xf32, #tpu.memory_space<vmem>>, vector<1x64x128xf32>
    %25 = vector.shape_cast %24 : vector<1x64x128xf32> to vector<64x128xf32>
    %cst_24 = arith.constant dense<0.000000e+00> : vector<16x128xf32>
    %26 = tpu.matmul %23, %25, %cst_24 {dimension_numbers = #tpu.dot_dimension_numbers<[1], [0], [0], [1], [0, 0, 1, 1], [], []>} : vector<16x64xf32>, vector<64x128xf32>, vector<16x128xf32> -> vector<16x128xf32>
    %27 = arith.addf %22, %26 : vector<16x128xf32>
    %c2 = arith.constant 2 : index
    %c0_25 = arith.constant 0 : index
    %28 = vector.load %arg7[%c2, %c0_25] : memref<18x64xf32, #tpu.memory_space<vmem>>, vector<16x64xf32>
    %c2_26 = arith.constant 2 : index
    %c0_27 = arith.constant 0 : index
    %c0_28 = arith.constant 0 : index
    %29 = vector.load %arg4[%c2_26, %c0_27, %c0_28] : memref<3x64x128xf32, #tpu.memory_space<vmem>>, vector<1x64x128xf32>
    %30 = vector.shape_cast %29 : vector<1x64x128xf32> to vector<64x128xf32>
    %cst_29 = arith.constant dense<0.000000e+00> : vector<16x128xf32>
    %31 = tpu.matmul %28, %30, %cst_29 {dimension_numbers = #tpu.dot_dimension_numbers<[1], [0], [0], [1], [0, 0, 1, 1], [], []>} : vector<16x64xf32>, vector<64x128xf32>, vector<16x128xf32> -> vector<16x128xf32>
    %32 = arith.addf %27, %31 : vector<16x128xf32>
    %c0_30 = arith.constant 0 : index
    %c0_31 = arith.constant 0 : index
    %33 = vector.load %arg5[%c0_30, %c0_31] : memref<1x128xf32, #tpu.memory_space<vmem>>, vector<1x128xf32>
    %34 = vector.broadcast %33 : vector<1x128xf32> to vector<16x128xf32>
    %35 = arith.addf %32, %34 : vector<16x128xf32>
    %c0_32 = arith.constant 0 : index
    %c0_33 = arith.constant 0 : index
    %c0_34 = arith.constant 0 : index
    %36 = vector.load %arg6[%c0_32, %c0_33, %c0_34] : memref<1x16x128xf32, #tpu.memory_space<vmem>>, vector<1x16x128xf32>
    %37 = vector.shape_cast %36 : vector<1x16x128xf32> to vector<16x128xf32>
    %38 = vector.shape_cast %35 : vector<16x128xf32> to vector<1x16x128xf32>
    tpu.vector_store %arg6[%c0_32, %c0_33, %c0_34], %38 {strides = array<i32>} : memref<1x16x128xf32, #tpu.memory_space<vmem>>, vector<1x16x128xf32>,
    return
  }
  func.func @transform_0(%arg0: i32) -> (i32, i32, i32) {
    %c0_i32 = arith.constant 0 : i32
    %c0_i32_0 = arith.constant 0 : i32
    %c0_i32_1 = arith.constant 0 : i32
    return %arg0, %c0_i32, %c0_i32_0 : i32, i32, i32
  }
  func.func @transform_1(%arg0: i32) -> (i32, i32) {
    %c0_i32 = arith.constant 0 : i32
    %c0_i32_0 = arith.constant 0 : i32
    %c0_i32_1 = arith.constant 0 : i32
    return %c0_i32, %c0_i32_0 : i32, i32
  }
  func.func @transform_2(%arg0: i32) -> (i32, i32) {
    %c0_i32 = arith.constant 0 : i32
    %c0_i32_0 = arith.constant 0 : i32
    %c0_i32_1 = arith.constant 0 : i32
    return %c0_i32, %c0_i32_0 : i32, i32
  }
  func.func @transform_3(%arg0: i32) -> (i32, i32, i32) {
    %c0_i32 = arith.constant 0 : i32
    %c0_i32_0 = arith.constant 0 : i32
    %c0_i32_1 = arith.constant 0 : i32
    %c0_i32_2 = arith.constant 0 : i32
    return %c0_i32, %c0_i32_0, %c0_i32_1 : i32, i32, i32
  }
  func.func @transform_4(%arg0: i32) -> (i32, i32) {
    %c0_i32 = arith.constant 0 : i32
    %c0_i32_0 = arith.constant 0 : i32
    %c0_i32_1 = arith.constant 0 : i32
    return %c0_i32, %c0_i32_0 : i32, i32
  }
  func.func @transform_5(%arg0: i32) -> (i32, i32, i32) {
    %c0_i32 = arith.constant 0 : i32
    %c0_i32_0 = arith.constant 0 : i32
    %c0_i32_1 = arith.constant 0 : i32
    return %arg0, %c0_i32, %c0_i32_0 : i32, i32, i32
  }
}

</mosaic_0001>

<llo_original>
// kernel: tile.18
$region0: #{tile.18}
  #allocation0 [shape = 's32[1]{0}', space=sflag, size = 0x4, scoped, tag = 'scoped memory for tile.18']
  %s0 = inlined_call_operand.vmem [shape: f32[4], index: 0, kind: input, shape index: {}]
  %s1 = inlined_call_operand.vmem [shape: f32[16,4], index: 1, kind: output, shape index: {}]
  // Predicated region
  $region2: #{tile.18} parent=0 // pred_check
    _
  $region3: #{tile.18} parent=0 // pred_check_branch
    %3 = sbr.rel (0) target = $region5
  $region4: #{tile.18} parent=0 // pred_region
    _
  $region5: #{tile.18} parent=0 // pred_fallthru
    _
  %v4 = vld [vmem:[%s0] ss:$0 sm:$0xff]
  %5 = vst [vmem:[%s1] sm:$0xff] %v4
  %s6 = scalar_lea.vmem %s1, 8
  %7 = vst [vmem:[%s6] sm:$0xff] %v4

// kernel: tile.19
$region0: #{tile.19}
  %s0 = inlined_call_operand.vmem [shape: f32[16,4], index: 0, kind: input, shape index: {}]
  %s1 = inlined_call_operand.vmem [shape: f32[1,64], index: 1, kind: output, shape index: {}]
  $region1: #{tile.19} parent=0
    #allocation0 [shape = 'u8[4096]{0}', space=vmem, size = 0x1000, scoped, tag = 'scoped mem for output reshape']
    %v2 = vld [vmem:[%s0] sm:$0x1]
    %vm3 = vcmask 31744
    %4 = vst.msk [vmem:[#allocation0] sm:$0x1] %vm3, %v2
    %s5 = scalar_lea.vmem %s0, 15
    %v6 = vld [vmem:[%s5] sm:$0x1]
    %7 = vrot.lane.b32.xlu0 %v6, 60
    %v8 = vpop.permute.xlu0 %7
    %vm9 = vcmask 523744
    %10 = vst.msk [vmem:[#allocation0] sm:$0x1] %vm9, %v8
    %s11 = scalar_lea.vmem %s0, 14
    %v12 = vld [vmem:[%s11] sm:$0x1]
    %13 = vrot.lane.b32.xlu0 %v12, 56
    %v14 = vpop.permute.xlu0 %13
    %vm15 = vcmask 490944
    %16 = vst.msk [vmem:[#allocation0] sm:$0x1] %vm15, %v14
    %s17 = scalar_lea.vmem %s0, 13
    %v18 = vld [vmem:[%s17] sm:$0x1]
    %19 = vrot.lane.b32.xlu0 %v18, 52
    %v20 = vpop.permute.xlu0 %19
    %vm21 = vcmask 458144
    %22 = vst.msk [vmem:[#allocation0] sm:$0x1] %vm21, %v20
    %s23 = scalar_lea.vmem %s0, 12
    %v24 = vld [vmem:[%s23] sm:$0x1]
    %25 = vrot.lane.b32.xlu0 %v24, 48
    %v26 = vpop.permute.xlu0 %25
    %vm27 = vcmask 425344
    %28 = vst.msk [vmem:[#allocation0] sm:$0x1] %vm27, %v26
    %s29 = scalar_lea.vmem %s0, 11
    %v30 = vld [vmem:[%s29] sm:$0x1]
    %31 = vrot.lane.b32.xlu0 %v30, 44
    %v32 = vpop.permute.xlu0 %31
    %vm33 = vcmask 392544
    %34 = vst.msk [vmem:[#allocation0] sm:$0x1] %vm33, %v32
    %s35 = scalar_lea.vmem %s0, 10
    %v36 = vld [vmem:[%s35] sm:$0x1]
    %37 = vrot.lane.b32.xlu0 %v36, 40
    %v38 = vpop.permute.xlu0 %37
    %vm39 = vcmask 359744
    %40 = vst.msk [vmem:[#allocation0] sm:$0x1] %vm39, %v38
    %s41 = scalar_lea.vmem %s0, 9
    %v42 = vld [vmem:[%s41] sm:$0x1]
    %43 = vrot.lane.b32.xlu0 %v42, 36
    %v44 = vpop.permute.xlu0 %43
    %vm45 = vcmask 326944
    %46 = vst.msk [vmem:[#allocation0] sm:$0x1] %vm45, %v44
    %s47 = scalar_lea.vmem %s0, 8
    %v48 = vld [vmem:[%s47] sm:$0x1]
    %49 = vrot.lane.b32.xlu0 %v48, 32
    %v50 = vpop.permute.xlu0 %49
    %vm51 = vcmask 294144
    %52 = vst.msk [vmem:[#allocation0] sm:$0x1] %vm51, %v50
    %s53 = scalar_lea.vmem %s0, 7
    %v54 = vld [vmem:[%s53] sm:$0x1]
    %55 = vrot.lane.b32.xlu0 %v54, 28
    %v56 = vpop.permute.xlu0 %55
    %vm57 = vcmask 261344
    %58 = vst.msk [vmem:[#allocation0] sm:$0x1] %vm57, %v56
    %s59 = scalar_lea.vmem %s0, 6
    %v60 = vld [vmem:[%s59] sm:$0x1]
    %61 = vrot.lane.b32.xlu0 %v60, 24
    %v62 = vpop.permute.xlu0 %61
    %vm63 = vcmask 228544
    %64 = vst.msk [vmem:[#allocation0] sm:$0x1] %vm63, %v62
    %s65 = scalar_lea.vmem %s0, 5
    %v66 = vld [vmem:[%s65] sm:$0x1]
    %67 = vrot.lane.b32.xlu0 %v66, 20
    %v68 = vpop.permute.xlu0 %67
    %vm69 = vcmask 195744
    %70 = vst.msk [vmem:[#allocation0] sm:$0x1] %vm69, %v68
    %s71 = scalar_lea.vmem %s0, 4
    %v72 = vld [vmem:[%s71] sm:$0x1]
    %73 = vrot.lane.b32.xlu0 %v72, 16
    %v74 = vpop.permute.xlu0 %73
    %vm75 = vcmask 162944
    %76 = vst.msk [vmem:[#allocation0] sm:$0x1] %vm75, %v74
    %s77 = scalar_lea.vmem %s0, 3
    %v78 = vld [vmem:[%s77] sm:$0x1]
    %79 = vrot.lane.b32.xlu0 %v78, 12
    %v80 = vpop.permute.xlu0 %79
    %vm81 = vcmask 130144
    %82 = vst.msk [vmem:[#allocation0] sm:$0x1] %vm81, %v80
    %s83 = scalar_lea.vmem %s0, 2
    %v84 = vld [vmem:[%s83] sm:$0x1]
    %85 = vrot.lane.b32.xlu0 %v84, 8
    %v86 = vpop.permute.xlu0 %85
    %vm87 = vcmask 97344
    %88 = vst.msk [vmem:[#allocation0] sm:$0x1] %vm87, %v86
    %s89 = scalar_lea.vmem %s0, 1
    %v90 = vld [vmem:[%s89] sm:$0x1]
    %91 = vrot.lane.b32.xlu0 %v90, 4
    %v92 = vpop.permute.xlu0 %91
    %vm93 = vcmask 64544
    %94 = vst.msk [vmem:[#allocation0] sm:$0x1] %vm93, %v92
    %s96 = sshllo.u32 0, 1
    %v98 = vld [vmem:[#allocation0] sm:%s96]
    %s99 = sshllo.u32 0, 1
    %100 = vst [vmem:[%s1] sm:%s99] %v98

// kernel: tile.28
$region0: #{tile.28}
  #allocation0 [shape = 's32[1]{0}', space=sflag, size = 0x4, scoped, tag = 'scoped memory for tile.28']
  %s0 = inlined_call_operand.vmem [shape: f32[8], index: 0, kind: input, shape index: {}]
  %s1 = inlined_call_operand.vmem [shape: f32[16,8], index: 1, kind: output, shape index: {}]
  // Predicated region
  $region2: #{tile.28} parent=0 // pred_check
    _
  $region3: #{tile.28} parent=0 // pred_check_branch
    %3 = sbr.rel (0) target = $region5
  $region4: #{tile.28} parent=0 // pred_region
    _
  $region5: #{tile.28} parent=0 // pred_fallthru
    _
  %v4 = vld [vmem:[%s0] ss:$0 sm:$0xff]
  %5 = vst [vmem:[%s1] sm:$0xff] %v4
  %s6 = scalar_lea.vmem %s1, 8
  %7 = vst [vmem:[%s6] sm:$0xff] %v4

// kernel: tile.29
$region0: #{tile.29}
  %s0 = inlined_call_operand.vmem [shape: f32[16,8], index: 0, kind: input, shape index: {}]
  %s1 = inlined_call_operand.vmem [shape: f32[1,128], index: 1, kind: output, shape index: {}]
  $region1: #{tile.29} parent=0
    #allocation0 [shape = 'u8[4096]{0}', space=vmem, size = 0x1000, scoped, tag = 'scoped mem for output reshape']
    %v2 = vld [vmem:[%s0] sm:$0x1]
    %vm3 = vcmask 64512
    %4 = vst.msk [vmem:[#allocation0] sm:$0x1] %vm3, %v2
    %s5 = scalar_lea.vmem %s0, 15
    %v6 = vld [vmem:[%s5] sm:$0x1]
    %7 = vrot.lane.b32.xlu0 %v6, 120
    %v8 = vpop.permute.xlu0 %7
    %vm9 = vcmask 1048512
    %10 = vst.msk [vmem:[#allocation0] sm:$0x1] %vm9, %v8
    %s11 = scalar_lea.vmem %s0, 14
    %v12 = vld [vmem:[%s11] sm:$0x1]
    %13 = vrot.lane.b32.xlu0 %v12, 112
    %v14 = vpop.permute.xlu0 %13
    %vm15 = vcmask 982912
    %16 = vst.msk [vmem:[#allocation0] sm:$0x1] %vm15, %v14
    %s17 = scalar_lea.vmem %s0, 13
    %v18 = vld [vmem:[%s17] sm:$0x1]
    %19 = vrot.lane.b32.xlu0 %v18, 104
    %v20 = vpop.permute.xlu0 %19
    %vm21 = vcmask 917312
    %22 = vst.msk [vmem:[#allocation0] sm:$0x1] %vm21, %v20
    %s23 = scalar_lea.vmem %s0, 12
    %v24 = vld [vmem:[%s23] sm:$0x1]
    %25 = vrot.lane.b32.xlu0 %v24, 96
    %v26 = vpop.permute.xlu0 %25
    %vm27 = vcmask 851712
    %28 = vst.msk [vmem:[#allocation0] sm:$0x1] %vm27, %v26
    %s29 = scalar_lea.vmem %s0, 11
    %v30 = vld [vmem:[%s29] sm:$0x1]
    %31 = vrot.lane.b32.xlu0 %v30, 88
    %v32 = vpop.permute.xlu0 %31
    %vm33 = vcmask 786112
    %34 = vst.msk [vmem:[#allocation0] sm:$0x1] %vm33, %v32
    %s35 = scalar_lea.vmem %s0, 10
    %v36 = vld [vmem:[%s35] sm:$0x1]
    %37 = vrot.lane.b32.xlu0 %v36, 80
    %v38 = vpop.permute.xlu0 %37
    %vm39 = vcmask 720512
    %40 = vst.msk [vmem:[#allocation0] sm:$0x1] %vm39, %v38
    %s41 = scalar_lea.vmem %s0, 9
    %v42 = vld [vmem:[%s41] sm:$0x1]
    %43 = vrot.lane.b32.xlu0 %v42, 72
    %v44 = vpop.permute.xlu0 %43
    %vm45 = vcmask 654912
    %46 = vst.msk [vmem:[#allocation0] sm:$0x1] %vm45, %v44
    %s47 = scalar_lea.vmem %s0, 8
    %v48 = vld [vmem:[%s47] sm:$0x1]
    %49 = vrot.lane.b32.xlu0 %v48, 64
    %v50 = vpop.permute.xlu0 %49
    %vm51 = vcmask 589312
    %52 = vst.msk [vmem:[#allocation0] sm:$0x1] %vm51, %v50
    %s53 = scalar_lea.vmem %s0, 7
    %v54 = vld [vmem:[%s53] sm:$0x1]
    %55 = vrot.lane.b32.xlu0 %v54, 56
    %v56 = vpop.permute.xlu0 %55
    %vm57 = vcmask 523712
    %58 = vst.msk [vmem:[#allocation0] sm:$0x1] %vm57, %v56
    %s59 = scalar_lea.vmem %s0, 6
    %v60 = vld [vmem:[%s59] sm:$0x1]
    %61 = vrot.lane.b32.xlu0 %v60, 48
    %v62 = vpop.permute.xlu0 %61
    %vm63 = vcmask 458112
    %64 = vst.msk [vmem:[#allocation0] sm:$0x1] %vm63, %v62
    %s65 = scalar_lea.vmem %s0, 5
    %v66 = vld [vmem:[%s65] sm:$0x1]
    %67 = vrot.lane.b32.xlu0 %v66, 40
    %v68 = vpop.permute.xlu0 %67
    %vm69 = vcmask 392512
    %70 = vst.msk [vmem:[#allocation0] sm:$0x1] %vm69, %v68
    %s71 = scalar_lea.vmem %s0, 4
    %v72 = vld [vmem:[%s71] sm:$0x1]
    %73 = vrot.lane.b32.xlu0 %v72, 32
    %v74 = vpop.permute.xlu0 %73
    %vm75 = vcmask 326912
    %76 = vst.msk [vmem:[#allocation0] sm:$0x1] %vm75, %v74
    %s77 = scalar_lea.vmem %s0, 3
    %v78 = vld [vmem:[%s77] sm:$0x1]
    %79 = vrot.lane.b32.xlu0 %v78, 24
    %v80 = vpop.permute.xlu0 %79
    %vm81 = vcmask 261312
    %82 = vst.msk [vmem:[#allocation0] sm:$0x1] %vm81, %v80
    %s83 = scalar_lea.vmem %s0, 2
    %v84 = vld [vmem:[%s83] sm:$0x1]
    %85 = vrot.lane.b32.xlu0 %v84, 16
    %v86 = vpop.permute.xlu0 %85
    %vm87 = vcmask 195712
    %88 = vst.msk [vmem:[#allocation0] sm:$0x1] %vm87, %v86
    %s89 = scalar_lea.vmem %s0, 1
    %v90 = vld [vmem:[%s89] sm:$0x1]
    %91 = vrot.lane.b32.xlu0 %v90, 8
    %v92 = vpop.permute.xlu0 %91
    %vm93 = vcmask 130112
    %94 = vst.msk [vmem:[#allocation0] sm:$0x1] %vm93, %v92
    %s96 = sshllo.u32 0, 1
    %v98 = vld [vmem:[#allocation0] sm:%s96]
    %s99 = sshllo.u32 0, 1
    %100 = vst [vmem:[%s1] sm:%s99] %v98

// kernel: bn_leaky_conv_nhwc.1
$region0: #{bn_leaky_conv_nhwc.1}
  #allocation0 [shape = 'u32[]', space=smem, size = 0x4, offset = 0x4, fixed_abs, tag = 'smem constant byte address 0x4 - core index']
  #allocation1 [shape = 'u32[144,128]{1,0:T(1,128)}', space=vmem, size = 0x12000, scoped, tag = 'internal scratch']
  #allocation2 [shape = 'f32[18,64]{1,0:T(8,128)}', space=vmem, size = 0x3000, scoped, tag = 'scratch operand']
  %s0 = inlined_call_operand.vmem [shape: f32[2,16,64], index: 0, kind: input, shape index: {}]
  %s1 = inlined_call_operand.vmem [shape: f32[1,64], index: 1, kind: input, shape index: {}]
  %s2 = inlined_call_operand.vmem [shape: f32[1,64], index: 2, kind: input, shape index: {}]
  %s3 = inlined_call_operand.vmem [shape: f32[3,64,128], index: 3, kind: input, shape index: {}]
  %s4 = inlined_call_operand.vmem [shape: f32[1,128], index: 4, kind: input, shape index: {}]
  %s5 = inlined_call_operand.vmem [shape: f32[2,16,128], index: 5, kind: output, shape index: {}]
  %s6 = sld [smem:[#allocation0]]
  $region53: #{bn_leaky_conv_nhwc.1} parent=0
    _
  %s8 = ssub.s32 1, %s6
  %s9 = scalar_select 0, %s8, %s6
  loop: start=0, step=1, limit=4
  $region2: #{bn_leaky_conv_nhwc.1} parent=0 // loop_pre_header
    _
  $region3: #{bn_leaky_conv_nhwc.1} parent=0 // loop_header
    %s11 = sphi 0, %s15
    %p12 = scmp.ge.s32.totalorder %s11, 4
    %s21 = sphi 0, %s23
    %s24 = sphi 0, %s21
    %s25 = sphi 0, %s24
    %s41 = sphi 0, %s25
    %s45 = sphi 0, %s45
    %s47 = sphi 0, %s45
    %s48 = sphi 0, %s47
    %s62 = sphi 0, %s48
    %s66 = sphi 0, %s66
    %s68 = sphi 0, %s66
    %s69 = sphi 0, %s68
    %s83 = sphi 0, %s69
    %s87 = sphi 0, %s87
    %s89 = sphi 0, %s87
    %s90 = sphi 0, %s89
    %s104 = sphi 0, %s90
    %s108 = sphi 0, %s108
    %s110 = sphi 0, %s108
    %s111 = sphi 0, %s110
    %s125 = sphi 0, %s111
    %s131 = sphi 0, %s133
    %s134 = sphi 0, %s131
    %s135 = sphi 0, %s134
    %s151 = sphi 0, %s135
  $region4: #{bn_leaky_conv_nhwc.1} parent=0 // loop_header_branch
    %14 = sbr.rel (%p12) target = $region8
  $region5: #{bn_leaky_conv_nhwc.1} parent=0 // loop_body
    %s16 = ssub.s32 %s11, 1
    %s17 = ssub.s32 %s11, 2
    %s18 = sadd.s32 %s11, 1
    %s19 = ssub.s32 %s11, %s18
    %p20 = scmp.eq.s32.totalorder %s19, 0
    %s22 = sadd.s32 %s21, 1
    %s23 = scalar_select %p20, %s21, %s22
    %p26 = pneg %p20
    %p27 = scmp.eq.s32.totalorder %s11, 1
    %p28 = por %p26, %p27
    %p29 = scmp.ne.s32.totalorder %s21, %s24
    %p30 = scmp.eq.s32.totalorder %s11, 0
    %p31 = por %p29, %p30
    %p32 = scmp.ne.s32.totalorder %s21, %s24
    %p33 = scmp.eq.s32.totalorder %s16, 1
    %p34 = por %p32, %p33
    %p35 = scmp.ne.s32.totalorder %s24, %s25
    %p36 = scmp.eq.s32.totalorder %s16, 0
    %p37 = por %p35, %p36
    %p38 = scmp.ne.s32.totalorder %s24, %s25
    %p39 = scmp.eq.s32.totalorder %s17, 1
    %p40 = por %p38, %p39
    %p42 = scmp.ne.s32.totalorder %s25, %s41
    %p43 = scmp.eq.s32.totalorder %s17, 0
    %p44 = por %p42, %p43
    %s46 = sadd.s32 %s45, 1
    %p49 = scmp.eq.s32.totalorder %s11, 1
    %p50 = scmp.ne.s32.totalorder %s45, %s47
    %p51 = scmp.eq.s32.totalorder %s11, 0
    %p52 = por %p50, %p51
    %p53 = scmp.ne.s32.totalorder %s45, %s47
    %p54 = scmp.eq.s32.totalorder %s16, 1
    %p55 = por %p53, %p54
    %p56 = scmp.ne.s32.totalorder %s47, %s48
    %p57 = scmp.eq.s32.totalorder %s16, 0
    %p58 = por %p56, %p57
    %p59 = scmp.ne.s32.totalorder %s47, %s48
    %p60 = scmp.eq.s32.totalorder %s17, 1
    %p61 = por %p59, %p60
    %p63 = scmp.ne.s32.totalorder %s48, %s62
    %p64 = scmp.eq.s32.totalorder %s17, 0
    %p65 = por %p63, %p64
    %s67 = sadd.s32 %s66, 1
    %p70 = scmp.eq.s32.totalorder %s11, 1
    %p71 = scmp.ne.s32.totalorder %s66, %s68
    %p72 = scmp.eq.s32.totalorder %s11, 0
    %p73 = por %p71, %p72
    %p74 = scmp.ne.s32.totalorder %s66, %s68
    %p75 = scmp.eq.s32.totalorder %s16, 1
    %p76 = por %p74, %p75
    %p77 = scmp.ne.s32.totalorder %s68, %s69
    %p78 = scmp.eq.s32.totalorder %s16, 0
    %p79 = por %p77, %p78
    %p80 = scmp.ne.s32.totalorder %s68, %s69
    %p81 = scmp.eq.s32.totalorder %s17, 1
    %p82 = por %p80, %p81
    %p84 = scmp.ne.s32.totalorder %s69, %s83
    %p85 = scmp.eq.s32.totalorder %s17, 0
    %p86 = por %p84, %p85
    %s88 = sadd.s32 %s87, 1
    %p91 = scmp.eq.s32.totalorder %s11, 1
    %p92 = scmp.ne.s32.totalorder %s87, %s89
    %p93 = scmp.eq.s32.totalorder %s11, 0
    %p94 = por %p92, %p93
    %p95 = scmp.ne.s32.totalorder %s87, %s89
    %p96 = scmp.eq.s32.totalorder %s16, 1
    %p97 = por %p95, %p96
    %p98 = scmp.ne.s32.totalorder %s89, %s90
    %p99 = scmp.eq.s32.totalorder %s16, 0
    %p100 = por %p98, %p99
    %p101 = scmp.ne.s32.totalorder %s89, %s90
    %p102 = scmp.eq.s32.totalorder %s17, 1
    %p103 = por %p101, %p102
    %p105 = scmp.ne.s32.totalorder %s90, %s104
    %p106 = scmp.eq.s32.totalorder %s17, 0
    %p107 = por %p105, %p106
    %s109 = sadd.s32 %s108, 1
    %p112 = scmp.eq.s32.totalorder %s11, 1
    %p113 = scmp.ne.s32.totalorder %s108, %s110
    %p114 = scmp.eq.s32.totalorder %s11, 0
    %p115 = por %p113, %p114
    %p116 = scmp.ne.s32.totalorder %s108, %s110
    %p117 = scmp.eq.s32.totalorder %s16, 1
    %p118 = por %p116, %p117
    %p119 = scmp.ne.s32.totalorder %s110, %s111
    %p120 = scmp.eq.s32.totalorder %s16, 0
    %p121 = por %p119, %p120
    %p122 = scmp.ne.s32.totalorder %s110, %s111
    %p123 = scmp.eq.s32.totalorder %s17, 1
    %p124 = por %p122, %p123
    %p126 = scmp.ne.s32.totalorder %s111, %s125
    %p127 = scmp.eq.s32.totalorder %s17, 0
    %p128 = por %p126, %p127
    %s129 = ssub.s32 %s11, %s18
    %p130 = scmp.eq.s32.totalorder %s129, 0
    %s132 = sadd.s32 %s131, 1
    %s133 = scalar_select %p130, %s131, %s132
    %p136 = pneg %p130
    %p137 = scmp.eq.s32.totalorder %s11, 1
    %p138 = por %p136, %p137
    %p139 = scmp.ne.s32.totalorder %s131, %s134
    %p140 = scmp.eq.s32.totalorder %s11, 0
    %p141 = por %p139, %p140
    %p142 = scmp.ne.s32.totalorder %s131, %s134
    %p143 = scmp.eq.s32.totalorder %s16, 1
    %p144 = por %p142, %p143
    %p145 = scmp.ne.s32.totalorder %s134, %s135
    %p146 = scmp.eq.s32.totalorder %s16, 0
    %p147 = por %p145, %p146
    %p148 = scmp.ne.s32.totalorder %s134, %s135
    %p149 = scmp.eq.s32.totalorder %s17, 1
    %p150 = por %p148, %p149
    %p152 = scmp.ne.s32.totalorder %s135, %s151
    %p153 = scmp.eq.s32.totalorder %s17, 0
    %p154 = por %p152, %p153
    %p155 = scmp.le.s32.totalorder 1, %s11
    %p156 = scmp.lt.s32.totalorder %s11, 3
    %p157 = pnand %p155, %p156
    %p158 = pneg %p157
    // Predicated region
    $region9: #{bn_leaky_conv_nhwc.1} parent=5 // pred_check
      _
    $region10: #{bn_leaky_conv_nhwc.1} parent=5 // pred_check_branch
      %160 = sbr.rel (%p157) target = $region12
    $region11: #{bn_leaky_conv_nhwc.1} parent=5 // pred_region
      %s161 = ssub.s32 %s11, 1
      // Predicated region
      $region13: #{bn_leaky_conv_nhwc.1} parent=11 // pred_check
        %p162 = pneg %p58
      $region14: #{bn_leaky_conv_nhwc.1} parent=11 // pred_check_branch
        %164 = sbr.rel (%p162) target = $region16
      $region15: #{bn_leaky_conv_nhwc.1} parent=11 // pred_region
        _
      $region16: #{bn_leaky_conv_nhwc.1} parent=11 // pred_fallthru
        _
      // Predicated region
      $region17: #{bn_leaky_conv_nhwc.1} parent=11 // pred_check
        %p165 = pneg %p79
      $region18: #{bn_leaky_conv_nhwc.1} parent=11 // pred_check_branch
        %167 = sbr.rel (%p165) target = $region20
      $region19: #{bn_leaky_conv_nhwc.1} parent=11 // pred_region
        _
      $region20: #{bn_leaky_conv_nhwc.1} parent=11 // pred_fallthru
        _
      // Predicated region
      $region21: #{bn_leaky_conv_nhwc.1} parent=11 // pred_check
        %p168 = pneg %p100
      $region22: #{bn_leaky_conv_nhwc.1} parent=11 // pred_check_branch
        %170 = sbr.rel (%p168) target = $region24
      $region23: #{bn_leaky_conv_nhwc.1} parent=11 // pred_region
        _
      $region24: #{bn_leaky_conv_nhwc.1} parent=11 // pred_fallthru
        _
      // Predicated region
      $region25: #{bn_leaky_conv_nhwc.1} parent=11 // pred_check
        %p171 = pneg %p121
      $region26: #{bn_leaky_conv_nhwc.1} parent=11 // pred_check_branch
        %173 = sbr.rel (%p171) target = $region28
      $region27: #{bn_leaky_conv_nhwc.1} parent=11 // pred_region
        _
      $region28: #{bn_leaky_conv_nhwc.1} parent=11 // pred_fallthru
        _
    $region12: #{bn_leaky_conv_nhwc.1} parent=5 // pred_fallthru
      _
    %p174 = scmp.lt.s32.totalorder %s11, 2
    // Predicated region
    $region29: #{bn_leaky_conv_nhwc.1} parent=5 // pred_check
      %p175 = pneg %p174
    $region30: #{bn_leaky_conv_nhwc.1} parent=5 // pred_check_branch
      %177 = sbr.rel (%p175) target = $region32
    $region31: #{bn_leaky_conv_nhwc.1} parent=5 // pred_region
      // Predicated region
      $region33: #{bn_leaky_conv_nhwc.1} parent=31 // pred_check
        %p178 = pneg %p31
      $region34: #{bn_leaky_conv_nhwc.1} parent=31 // pred_check_branch
        %180 = sbr.rel (%p178) target = $region36
      $region35: #{bn_leaky_conv_nhwc.1} parent=31 // pred_region
        %p181 = scmp.lt.s32.totalorder %s11, 1
        %s182 = scalar_select %p181, %s11, 1
        %s183 = smul.addr %s182, 2
        %s184 = smul.addr %s183, 8
        %s185 = scalar_lea.vmem %s0, %s184
      $region36: #{bn_leaky_conv_nhwc.1} parent=31 // pred_fallthru
        _
    $region32: #{bn_leaky_conv_nhwc.1} parent=5 // pred_fallthru
      _
    %p186 = scmp.le.s32.totalorder 1, %s11
    %p187 = scmp.lt.s32.totalorder %s11, 3
    %p188 = pnand %p186, %p187
    %p189 = pneg %p188
    // Predicated region
    $region37: #{bn_leaky_conv_nhwc.1} parent=5 // pred_check
      _
    $region38: #{bn_leaky_conv_nhwc.1} parent=5 // pred_check_branch
      %191 = sbr.rel (%p188) target = $region40
    $region39: #{bn_leaky_conv_nhwc.1} parent=5 // pred_region
      %s192 = ssub.s32 %s11, 1
      %p193 = scmp.lt.s32.totalorder %s16, 1
      %s194 = scalar_select %p193, %s16, 1
      %s195 = smul.addr %s194, 2
      %s196 = smul.addr %s195, 8
      %s197 = scalar_lea.vmem %s0, %s196
      %p198 = pneg %p37
      %p199 = pneg %p34
      %p200 = pneg %p58
      %p201 = pneg %p55
      %p202 = pneg %p79
      %p203 = pneg %p76
      %p204 = pneg %p100
      %p205 = pneg %p97
      %p206 = pneg %p121
      %p207 = pneg %p118
      %p208 = pneg %p147
      %p209 = pneg %p144
      %p210 = scmp.lt.s32.totalorder %s16, 1
      %s211 = scalar_select %p210, %s16, 1
      %s212 = smul.addr %s211, 2
      %s213 = smul.addr %s212, 8
      %s214 = scalar_lea.vmem %s5, %s213
      %p215 = scmp.lt.s32.totalorder %s16, 1
      %s216 = scalar_select %p215, %s16, 1
      %s217 = smul.addr %s216, 2
      %s218 = smul.addr %s217, 8
      %s219 = scalar_lea.vmem %s0, %s218
      %p220 = scmp.lt.s32.totalorder %s16, 1
      %s221 = scalar_select %p220, %s16, 1
      %s222 = smul.addr %s221, 2
      %s223 = smul.addr %s222, 8
      %s224 = scalar_lea.vmem %s5, %s223
      %v225 = vld [vmem:[%s219] sm:$0xff]
      %v226 = vld [vmem:[%s219 + $0x8] sm:$0xff]
      %v227 = vld [vmem:[%s1] sm:$0x1]
      %v229 = vlaneseq
      %v230 = vshrl.u32 %v229, 7
      %v231 = vsub.s32 0, %v230
      %v232 = vrot.slane %v227, %v231
      %v234 = vmul.f32 %v225, %v232
      %v235 = vmul.f32 %v226, %v232
      %v236 = vld [vmem:[%s2] sm:$0x1]
      %v238 = vlaneseq
      %v239 = vshrl.u32 %v238, 7
      %v240 = vsub.s32 0, %v239
      %v241 = vrot.slane %v236, %v240
      %v243 = vadd.f32 %v234, %v241
      %v244 = vadd.f32 %v235, %v241
      %vm245 = vcmp.ge.f32.partialorder %v243, 0.0
      %vm246 = vcmp.ge.f32.partialorder %v244, 0.0
      %v247 = vmul.f32 %v243, 0.01
      %v248 = vmul.f32 %v244, 0.01
      %v249 = vsel %vm245, %v243, %v247
      %v250 = vsel %vm246, %v244, %v248
      %vm251 = vcmask 516096
      %252 = vst.msk [vmem:[#allocation2] sm:$0x1] %vm251, 0.0
      %253 = vst.msk [vmem:[#allocation2 + $0x11] sm:$0x1] %vm251, 0.0
      %vm254 = vcmask 523264
      %255 = vst.msk [vmem:[#allocation2 + $0x1] sm:$0xff] %vm254, %v249
      %256 = vst.msk [vmem:[#allocation2 + $0x9] sm:$0xff] %vm254, %v250
      %v257 = vld [vmem:[#allocation2] sm:$0xff]
      %v258 = vld [vmem:[#allocation2 + $0x8] sm:$0xff]
      %v259 = vld [vmem:[%s3] sm:$0xff]
      %v260 = vld [vmem:[%s3 + $0x8] sm:$0xff]
      %v261 = vld [vmem:[%s3 + $0x10] sm:$0xff]
      %v262 = vld [vmem:[%s3 + $0x18] sm:$0xff]
      %v263 = vld [vmem:[%s3 + $0x20] sm:$0xff]
      %v264 = vld [vmem:[%s3 + $0x28] sm:$0xff]
      %v265 = vld [vmem:[%s3 + $0x30] sm:$0xff]
      %v266 = vld [vmem:[%s3 + $0x38] sm:$0xff]
      %v267 = vld [vmem:[#allocation2 + $0x1] sm:$0xff]
      %v268 = vld [vmem:[#allocation2 + $0x9] sm:$0xff]
      %s269 = scalar_lea.vmem %s3, 64
      %v270 = vld [vmem:[%s269] sm:$0xff]
      %v271 = vld [vmem:[%s269 + $0x8] sm:$0xff]
      %v272 = vld [vmem:[%s269 + $0x10] sm:$0xff]
      %v273 = vld [vmem:[%s269 + $0x18] sm:$0xff]
      %v274 = vld [vmem:[%s269 + $0x20] sm:$0xff]
      %v275 = vld [vmem:[%s269 + $0x28] sm:$0xff]
      %v276 = vld [vmem:[%s269 + $0x30] sm:$0xff]
      %v277 = vld [vmem:[%s269 + $0x38] sm:$0xff]
      %v279 = vsel %vm254, %v267, 0
      %v282 = vsel %vm254, %v268, 0
      %284 = vmatprep.subr.mxu0 0.0
      %285 = vmatpush1.msra.mxu0 %v270
      %286 = vmatprep.subr.mxu0 0.0
      %287 = vmatpush1.msra.mxu0 %v271
      %288 = vmatprep.subr.mxu0 0.0
      %289 = vmatpush1.msra.mxu0 %v272
      %290 = vmatprep.subr.mxu0 0.0
      %291 = vmatpush1.msra.mxu0 %v273
      %292 = vmatprep.subr.mxu0 0.0
      %293 = vmatpush1.msra.mxu0 %v274
      %294 = vmatprep.subr.mxu0 0.0
      %295 = vmatpush1.msra.mxu0 %v275
      %296 = vmatprep.subr.mxu0 0.0
      %297 = vmatpush1.msra.mxu0 %v276
      %298 = vmatprep.subr.mxu0 0.0
      %299 = vmatpush1.msra.mxu0 %v277
      %300 = vmatprep.subr.mxu0 0.0
      %301 = vmatpush1.msra.mxu0 0.0
      %302 = vmatprep.subr.mxu0 0.0
      %303 = vmatpush1.msra.mxu0 0.0
      %304 = vmatprep.subr.mxu0 0.0
      %305 = vmatpush1.msra.mxu0 0.0
      %306 = vmatprep.subr.mxu0 0.0
      %307 = vmatpush1.msra.mxu0 0.0
      %308 = vmatprep.subr.mxu0 0.0
      %309 = vmatpush1.msra.mxu0 0.0
      %310 = vmatprep.subr.mxu0 0.0
      %311 = vmatpush1.msra.mxu0 0.0
      %312 = vmatprep.subr.mxu0 0.0
      %313 = vmatpush1.msra.mxu0 0.0
      %314 = vmatprep.subr.mxu0 0.0
      %315 = vmatpush1.msra.mxu0 0.0
      %316 = vmatprep.subr.mxu0 0.0
      %317 = vmatpush1.msra.mxu0 0.0
      %318 = vmatprep.subr.mxu0 0.0
      %319 = vmatpush1.msra.mxu0 0.0
      %320 = vmatprep.subr.mxu0 0.0
      %321 = vmatpush1.msra.mxu0 0.0
      %322 = vmatprep.subr.mxu0 0.0
      %323 = vmatpush1.msra.mxu0 0.0
      %324 = vmatprep.subr.mxu0 0.0
      %325 = vmatpush1.msra.mxu0 0.0
      %326 = vmatprep.subr.mxu0 0.0
      %327 = vmatpush1.msra.mxu0 0.0
      %328 = vmatprep.subr.mxu0 0.0
      %329 = vmatpush1.msra.mxu0 0.0
      %330 = vmatprep.subr.mxu0 0.0
      %331 = vmatpush1.msra.mxu0 0.0
      %332 = vmatprep.subr.mxu0 0.0
      %333 = vmatpush1.msra.mxu0 0.0
      %334 = vmatprep.subr.mxu0 0.0
      %335 = vmatpush1.msra.mxu0 0.0
      %336 = vmatprep.subr.mxu0 0.0
      %337 = vmatpush1.msra.mxu0 0.0
      %338 = vmatprep.subr.mxu0 0.0
      %339 = vmatpush1.msra.mxu0 0.0
      %340 = vmatprep.subr.mxu0 0.0
      %341 = vmatpush1.msra.mxu0 0.0
      %342 = vmatprep.subr.mxu0 0.0
      %343 = vmatpush1.msra.mxu0 0.0
      %344 = vmatprep.subr.mxu0 0.0
      %345 = vmatpush1.msra.mxu0 0.0
      %346 = vmatprep.subr.mxu0 0.0
      %347 = vmatpush1.msra.mxu0 0.0
      %348 = vmatprep.mubr.f32.mxu0 0.0
      %349 = vmatmul.mubr.f32.gmra.mrb[0].mxu0 %v279
      %v350 = vpop.f32.mrb[0].mxu0
      %v351 = vadd.f32 0.0, %v350
      %v352 = vpop.f32.mrb[0].mxu0
      %353 = vmatprep.mubr.f32.mxu0 0.0
      %354 = vmatmul.mubr.f32.gmra.mrb[0].mxu0 %v282
      %v355 = vpop.f32.mrb[0].mxu0
      %v356 = vadd.f32 0.0, %v355
      %v357 = vpop.f32.mrb[0].mxu0
      %358 = vdwg.mxu0
      %v360 = vsel %vm254, %v257, 0
      %v363 = vsel %vm254, %v258, 0
      %365 = vmatprep.subr.mxu0 0.0
      %366 = vmatpush1.msra.mxu0 %v259
      %367 = vmatprep.subr.mxu0 0.0
      %368 = vmatpush1.msra.mxu0 %v260
      %369 = vmatprep.subr.mxu0 0.0
      %370 = vmatpush1.msra.mxu0 %v261
      %371 = vmatprep.subr.mxu0 0.0
      %372 = vmatpush1.msra.mxu0 %v262
      %373 = vmatprep.subr.mxu0 0.0
      %374 = vmatpush1.msra.mxu0 %v263
      %375 = vmatprep.subr.mxu0 0.0
      %376 = vmatpush1.msra.mxu0 %v264
      %377 = vmatprep.subr.mxu0 0.0
      %378 = vmatpush1.msra.mxu0 %v265
      %379 = vmatprep.subr.mxu0 0.0
      %380 = vmatpush1.msra.mxu0 %v266
      %381 = vmatprep.subr.mxu0 0.0
      %382 = vmatpush1.msra.mxu0 0.0
      %383 = vmatprep.subr.mxu0 0.0
      %384 = vmatpush1.msra.mxu0 0.0
      %385 = vmatprep.subr.mxu0 0.0
      %386 = vmatpush1.msra.mxu0 0.0
      %387 = vmatprep.subr.mxu0 0.0
      %388 = vmatpush1.msra.mxu0 0.0
      %389 = vmatprep.subr.mxu0 0.0
      %390 = vmatpush1.msra.mxu0 0.0
      %391 = vmatprep.subr.mxu0 0.0
      %392 = vmatpush1.msra.mxu0 0.0
      %393 = vmatprep.subr.mxu0 0.0
      %394 = vmatpush1.msra.mxu0 0.0
      %395 = vmatprep.subr.mxu0 0.0
      %396 = vmatpush1.msra.mxu0 0.0
      %397 = vmatprep.subr.mxu0 0.0
      %398 = vmatpush1.msra.mxu0 0.0
      %399 = vmatprep.subr.mxu0 0.0
      %400 = vmatpush1.msra.mxu0 0.0
      %401 = vmatprep.subr.mxu0 0.0
      %402 = vmatpush1.msra.mxu0 0.0
      %403 = vmatprep.subr.mxu0 0.0
      %404 = vmatpush1.msra.mxu0 0.0
      %405 = vmatprep.subr.mxu0 0.0
      %406 = vmatpush1.msra.mxu0 0.0
      %407 = vmatprep.subr.mxu0 0.0
      %408 = vmatpush1.msra.mxu0 0.0
      %409 = vmatprep.subr.mxu0 0.0
      %410 = vmatpush1.msra.mxu0 0.0
      %411 = vmatprep.subr.mxu0 0.0
      %412 = vmatpush1.msra.mxu0 0.0
      %413 = vmatprep.subr.mxu0 0.0
      %414 = vmatpush1.msra.mxu0 0.0
      %415 = vmatprep.subr.mxu0 0.0
      %416 = vmatpush1.msra.mxu0 0.0
      %417 = vmatprep.subr.mxu0 0.0
      %418 = vmatpush1.msra.mxu0 0.0
      %419 = vmatprep.subr.mxu0 0.0
      %420 = vmatpush1.msra.mxu0 0.0
      %421 = vmatprep.subr.mxu0 0.0
      %422 = vmatpush1.msra.mxu0 0.0
      %423 = vmatprep.subr.mxu0 0.0
      %424 = vmatpush1.msra.mxu0 0.0
      %425 = vmatprep.subr.mxu0 0.0
      %426 = vmatpush1.msra.mxu0 0.0
      %427 = vmatprep.subr.mxu0 0.0
      %428 = vmatpush1.msra.mxu0 0.0
      %429 = vmatprep.mubr.f32.mxu0 0.0
      %430 = vmatmul.mubr.f32.gmra.mrb[0].mxu0 %v360
      %v431 = vpop.f32.mrb[0].mxu0
      %v432 = vadd.f32 %v351, %v431
      %v433 = vpop.f32.mrb[0].mxu0
      %434 = vmatprep.mubr.f32.mxu0 0.0
      %435 = vmatmul.mubr.f32.gmra.mrb[0].mxu0 %v363
      %v436 = vpop.f32.mrb[0].mxu0
      %v437 = vadd.f32 %v356, %v436
      %v438 = vpop.f32.mrb[0].mxu0
      %439 = vdwg.mxu0
      %v440 = vld [vmem:[#allocation2 + $0x2] sm:$0xff]
      %v441 = vld [vmem:[#allocation2 + $0xa] sm:$0xff]
      %s442 = scalar_lea.vmem %s3, 128
      %v443 = vld [vmem:[%s442] sm:$0xff]
      %v444 = vld [vmem:[%s442 + $0x8] sm:$0xff]
      %v445 = vld [vmem:[%s442 + $0x10] sm:$0xff]
      %v446 = vld [vmem:[%s442 + $0x18] sm:$0xff]
      %v447 = vld [vmem:[%s442 + $0x20] sm:$0xff]
      %v448 = vld [vmem:[%s442 + $0x28] sm:$0xff]
      %v449 = vld [vmem:[%s442 + $0x30] sm:$0xff]
      %v450 = vld [vmem:[%s442 + $0x38] sm:$0xff]
      %v452 = vsel %vm254, %v440, 0
      %v455 = vsel %vm254, %v441, 0
      %457 = vmatprep.subr.mxu0 0.0
      %458 = vmatpush1.msra.mxu0 %v443
      %459 = vmatprep.subr.mxu0 0.0
      %460 = vmatpush1.msra.mxu0 %v444
      %461 = vmatprep.subr.mxu0 0.0
      %462 = vmatpush1.msra.mxu0 %v445
      %463 = vmatprep.subr.mxu0 0.0
      %464 = vmatpush1.msra.mxu0 %v446
      %465 = vmatprep.subr.mxu0 0.0
      %466 = vmatpush1.msra.mxu0 %v447
      %467 = vmatprep.subr.mxu0 0.0
      %468 = vmatpush1.msra.mxu0 %v448
      %469 = vmatprep.subr.mxu0 0.0
      %470 = vmatpush1.msra.mxu0 %v449
      %471 = vmatprep.subr.mxu0 0.0
      %472 = vmatpush1.msra.mxu0 %v450
      %473 = vmatprep.subr.mxu0 0.0
      %474 = vmatpush1.msra.mxu0 0.0
      %475 = vmatprep.subr.mxu0 0.0
      %476 = vmatpush1.msra.mxu0 0.0
      %477 = vmatprep.subr.mxu0 0.0
      %478 = vmatpush1.msra.mxu0 0.0
      %479 = vmatprep.subr.mxu0 0.0
      %480 = vmatpush1.msra.mxu0 0.0
      %481 = vmatprep.subr.mxu0 0.0
      %482 = vmatpush1.msra.mxu0 0.0
      %483 = vmatprep.subr.mxu0 0.0
      %484 = vmatpush1.msra.mxu0 0.0
      %485 = vmatprep.subr.mxu0 0.0
      %486 = vmatpush1.msra.mxu0 0.0
      %487 = vmatprep.subr.mxu0 0.0
      %488 = vmatpush1.msra.mxu0 0.0
      %489 = vmatprep.subr.mxu0 0.0
      %490 = vmatpush1.msra.mxu0 0.0
      %491 = vmatprep.subr.mxu0 0.0
      %492 = vmatpush1.msra.mxu0 0.0
      %493 = vmatprep.subr.mxu0 0.0
      %494 = vmatpush1.msra.mxu0 0.0
      %495 = vmatprep.subr.mxu0 0.0
      %496 = vmatpush1.msra.mxu0 0.0
      %497 = vmatprep.subr.mxu0 0.0
      %498 = vmatpush1.msra.mxu0 0.0
      %499 = vmatprep.subr.mxu0 0.0
      %500 = vmatpush1.msra.mxu0 0.0
      %501 = vmatprep.subr.mxu0 0.0
      %502 = vmatpush1.msra.mxu0 0.0
      %503 = vmatprep.subr.mxu0 0.0
      %504 = vmatpush1.msra.mxu0 0.0
      %505 = vmatprep.subr.mxu0 0.0
      %506 = vmatpush1.msra.mxu0 0.0
      %507 = vmatprep.subr.mxu0 0.0
      %508 = vmatpush1.msra.mxu0 0.0
      %509 = vmatprep.subr.mxu0 0.0
      %510 = vmatpush1.msra.mxu0 0.0
      %511 = vmatprep.subr.mxu0 0.0
      %512 = vmatpush1.msra.mxu0 0.0
      %513 = vmatprep.subr.mxu0 0.0
      %514 = vmatpush1.msra.mxu0 0.0
      %515 = vmatprep.subr.mxu0 0.0
      %516 = vmatpush1.msra.mxu0 0.0
      %517 = vmatprep.subr.mxu0 0.0
      %518 = vmatpush1.msra.mxu0 0.0
      %519 = vmatprep.subr.mxu0 0.0
      %520 = vmatpush1.msra.mxu0 0.0
      %521 = vmatprep.mubr.f32.mxu0 0.0
      %522 = vmatmul.mubr.f32.gmra.mrb[0].mxu0 %v452
      %v523 = vpop.f32.mrb[0].mxu0
      %v524 = vadd.f32 0.0, %v523
      %v525 = vpop.f32.mrb[0].mxu0
      %526 = vmatprep.mubr.f32.mxu0 0.0
      %527 = vmatmul.mubr.f32.gmra.mrb[0].mxu0 %v455
      %v528 = vpop.f32.mrb[0].mxu0
      %v529 = vadd.f32 0.0, %v528
      %v530 = vpop.f32.mrb[0].mxu0
      %531 = vdwg.mxu0
      %v532 = vadd.f32 %v432, %v524
      %v533 = vadd.f32 %v437, %v529
      %v534 = vld [vmem:[%s4] sm:$0x1]
      %v536 = vlaneseq
      %v537 = vshrl.u32 %v536, 7
      %v538 = vsub.s32 0, %v537
      %v539 = vrot.slane %v534, %v538
      %v541 = vadd.f32 %v532, %v539
      %v542 = vadd.f32 %v533, %v539
      %543 = vst [vmem:[%s224] sm:$0xff] %v541
      %544 = vst [vmem:[%s224 + $0x8] sm:$0xff] %v542
      %p545 = scmp.lt.s32.totalorder %s16, 1
      %s546 = scalar_select %p545, %s16, 1
      %s547 = smul.addr %s546, 2
      %s548 = smul.addr %s547, 8
      %s549 = scalar_lea.vmem %s5, %s548
      // Predicated region
      $region41: #{bn_leaky_conv_nhwc.1} parent=39 // pred_check
        %p550 = pneg %p144
      $region42: #{bn_leaky_conv_nhwc.1} parent=39 // pred_check_branch
        %552 = sbr.rel (%p550) target = $region44
      $region43: #{bn_leaky_conv_nhwc.1} parent=39 // pred_region
        _
      $region44: #{bn_leaky_conv_nhwc.1} parent=39 // pred_fallthru
        _
    $region40: #{bn_leaky_conv_nhwc.1} parent=5 // pred_fallthru
      _
    %p553 = scmp.le.s32.totalorder 2, %s11
    // Predicated region
    $region45: #{bn_leaky_conv_nhwc.1} parent=5 // pred_check
      %p554 = pneg %p553
    $region46: #{bn_leaky_conv_nhwc.1} parent=5 // pred_check_branch
      %556 = sbr.rel (%p554) target = $region48
    $region47: #{bn_leaky_conv_nhwc.1} parent=5 // pred_region
      %s557 = ssub.s32 %s11, 2
      // Predicated region
      $region49: #{bn_leaky_conv_nhwc.1} parent=47 // pred_check
        %p558 = pneg %p150
      $region50: #{bn_leaky_conv_nhwc.1} parent=47 // pred_check_branch
        %560 = sbr.rel (%p558) target = $region52
      $region51: #{bn_leaky_conv_nhwc.1} parent=47 // pred_region
        %p561 = scmp.lt.s32.totalorder %s17, 1
        %s562 = scalar_select %p561, %s17, 1
        %s563 = smul.addr %s562, 2
        %s564 = smul.addr %s563, 8
        %s565 = scalar_lea.vmem %s5, %s564
      $region52: #{bn_leaky_conv_nhwc.1} parent=47 // pred_fallthru
        _
    $region48: #{bn_leaky_conv_nhwc.1} parent=5 // pred_fallthru
      _
  $region6: #{bn_leaky_conv_nhwc.1} parent=0 // loop_footer
    %s15 = sadd.s32 1, %s11
  $region7: #{bn_leaky_conv_nhwc.1} parent=0 // loop_footer_branch
    %10 = sbr.rel target = $region3
  $region8: #{bn_leaky_conv_nhwc.1} parent=0 // loop_exit
    _

</llo_original>
